<compile_context>
chip_gen: v5e
topology: v5e:2x2
jax: 0.10.0
libtpu: 0.0.40
codegen_flags: <defaults>
</compile_context>

<pallas_src>
import functools

import jax
import jax.numpy as jnp
from jax.experimental import pallas as pl
from jax.experimental.pallas import tpu as pltpu


def _mycell_seq_kernel(w_ref, b_ref, h0_ref, x_ref, out_ref, h_acc, *, batch_valid):
    """One timestep of MyCell per grid step; h carried in VMEM scratch.

    Block shapes seen by the kernel:
      w_ref  : (F_out, F_in)   resident (PyTorch layout, no transpose needed)
      b_ref  : (F_out, 1)      resident
      h0_ref : (F_out, Bp)     resident (read only at t == 0)
      x_ref  : (F_in, Bp)      per-step
      out_ref: (F_out, Bp)     per-step
      h_acc  : (F_out, Bp) f32 VMEM scratch (the recurrent state)
    """
    t = pl.program_id(0)

    @pl.when(t == 0)
    def _init():
        h_acc[...] = h0_ref[...].astype(jnp.float32)

    x = x_ref[...].astype(jnp.float32)          # (F_in, Bp)
    w = w_ref[...].astype(jnp.float32)          # (F_out, F_in)
    f_out, bp = out_ref.shape
    f_in = x_ref.shape[0]

    # Linear: y[o, n] = sum_i w[o, i] * x[i, n] + b[o]
    # Unrolled K=4 VPU FMA chain — a 4x4 contraction does not pay MXU push/pop.
    y = jnp.zeros((f_out, bp), jnp.float32)
    for i in range(f_in):                        # static, fully unrolled
        y = y + w[:, i:i + 1] * x[i:i + 1, :]    # lane-bcast column * sublane-bcast row
    y = y + b_ref[...]                           # (F_out, 1) broadcast along lanes

    # Decision gate: sign of sum(linear(x)) over the REAL batch columns only
    # (lane padding must not influence the gate decision).
    col = jax.lax.broadcasted_iota(jnp.int32, (f_out, bp), 1)
    s = jnp.sum(jnp.where(col < batch_valid, y, 0.0))
    sign = jnp.where(s > 0.0, jnp.float32(1.0), jnp.float32(-1.0))

    new_h = jnp.tanh(sign * y + h_acc[...])
    h_acc[...] = new_h
    out_ref[...] = new_h.astype(out_ref.dtype)   # lane-dense (Bp = multiple of 128) store


def mycell_sequence(xs, h0, w, b):
    """Apply MyCell over T timesteps in a single pallas_call.

    xs: (T, B, F_in)   per-step inputs (PyTorch (batch, features) convention)
    h0: (B, F_out)     initial hidden state
    w : (F_out, F_in)  PyTorch nn.Linear weight layout
    b : (F_out,)       bias
    returns hs: (T, B, F_out) — new_h after each step.
    """
    T, B, F_in = xs.shape
    F_out = w.shape[0]
    Bp = pl.cdiv(B, 128) * 128                   # lane-dense: pad batch to 128k lanes

    # Layout plumbing (outside the kernel): batch -> lane axis, zero-pad lanes.
    xs_t = jnp.pad(jnp.transpose(xs, (0, 2, 1)), ((0, 0), (0, 0), (0, Bp - B)))
    h0_t = jnp.pad(h0.T, ((0, 0), (0, Bp - B)))  # (F_out, Bp)
    b2 = b.reshape(F_out, 1)

    kernel = functools.partial(_mycell_seq_kernel, batch_valid=B)

    out = pl.pallas_call(
        kernel,
        out_shape=jax.ShapeDtypeStruct((T, F_out, Bp), xs.dtype),
        grid_spec=pltpu.PrefetchScalarGridSpec(
            num_scalar_prefetch=0,
            grid=(T,),
            in_specs=[
                pl.BlockSpec((F_out, F_in), lambda t: (0, 0)),        # weight (resident)
                pl.BlockSpec((F_out, 1), lambda t: (0, 0)),           # bias   (resident)
                pl.BlockSpec((F_out, Bp), lambda t: (0, 0)),          # h0     (resident)
                pl.BlockSpec((None, F_in, Bp), lambda t: (t, 0, 0)),  # x_t    (per step)
            ],
            out_specs=pl.BlockSpec((None, F_out, Bp), lambda t: (t, 0, 0)),
            scratch_shapes=[pltpu.VMEM((F_out, Bp), jnp.float32)],    # recurrent h
        ),
        compiler_params=pltpu.CompilerParams(
            # Time axis is a recurrence (h carried in VMEM) -> must be arbitrary.
            dimension_semantics=("arbitrary",),
        ),
    )(w, b2, h0_t, xs_t)

    # (T, F_out, Bp) -> (T, B, F_out), dropping lane padding.
    return jnp.transpose(out[:, :, :B], (0, 2, 1))


def mycell_forward(x, h, w, b):
    """MyCell.forward(x, h) -> (new_h, new_h)  — the T == 1 case of the fused kernel."""
    new_h = mycell_sequence(x[None], h, w, b)[0]
    return new_h, new_h


if __name__ == "__main__":
    key = jax.random.PRNGKey(0)
    k_x, k_h, k_w, k_b, k_seq = jax.random.split(key, 5)

    B, F = 8, 4  # batch=8, features=4 (nn.Linear(4, 4))
    x = jax.random.normal(k_x, (B, F), dtype=jnp.float32)
    h = jax.random.normal(k_h, (B, F), dtype=jnp.float32)

    # Deterministic parameter init (mimics PyTorch's U(-1/sqrt(fan_in), 1/sqrt(fan_in)))
    bound = 1.0 / jnp.sqrt(jnp.float32(F))
    w = jax.random.uniform(k_w, (F, F), dtype=jnp.float32, minval=-bound, maxval=bound)
    b = jax.random.uniform(k_b, (F,), dtype=jnp.float32, minval=-bound, maxval=bound)

    def ref_cell(x_in, h_in):
        y = x_in @ w.T + b
        y = jnp.where(jnp.sum(y) > 0, y, -y)
        return jnp.tanh(y + h_in)

    # --- single MyCell.forward (the module spec) ---
    new_h, new_h2 = mycell_forward(x, h, w, b)
    jax.block_until_ready(new_h)

    ref = ref_cell(x, h)
    assert jnp.allclose(new_h, ref, atol=1e-5, rtol=1e-5)
    assert jnp.array_equal(new_h, new_h2)

    # --- fused recurrence: T MyCell steps in ONE pallas_call (perf feedback #1) ---
    T = 8
    xs = jax.random.normal(k_seq, (T, B, F), dtype=jnp.float32)
    hs = mycell_sequence(xs, h, w, b)
    jax.block_until_ready(hs)

    h_ref = h
    for t in range(T):
        h_ref = ref_cell(xs[t], h_ref)
        assert jnp.allclose(hs[t], h_ref, atol=1e-4, rtol=1e-4)

    print("KERNEL_OK")
</pallas_src>

<mosaic_0001>
module attributes {stable_mosaic.version = 11 : i64} {
  func.func @_mycell_seq_kernel(%arg0: i32, %arg1: memref<4x4xf32, #tpu.memory_space<vmem>>, %arg2: memref<4x1xf32, #tpu.memory_space<vmem>>, %arg3: memref<4x128xf32, #tpu.memory_space<vmem>>, %arg4: memref<1x4x128xf32, #tpu.memory_space<vmem>>, %arg5: memref<1x4x128xf32, #tpu.memory_space<vmem>>, %arg6: memref<4x128xf32, #tpu.memory_space<vmem>>) attributes {dimension_semantics = [#tpu.dimension_semantics<arbitrary>], iteration_bounds = array<i64: 1>, scalar_prefetch = 0 : i64, scratch_operands = 1 : i64, tpu.core_type = #tpu.core_type<tc>, window_params = [{pipeline_mode = #tpu.pipeline_mode<synchronous>, transform_indices = @transform_0, window_bounds = array<i64: 4, 4>}, {pipeline_mode = #tpu.pipeline_mode<synchronous>, transform_indices = @transform_1, window_bounds = array<i64: 4, 1>}, {pipeline_mode = #tpu.pipeline_mode<synchronous>, transform_indices = @transform_2, window_bounds = array<i64: 4, 128>}, {transform_indices = @transform_3, window_bounds = array<i64: 1, 4, 128>}, {transform_indices = @transform_4, window_bounds = array<i64: 1, 4, 128>}]} {
    %c0_i32 = arith.constant 0 : i32
    %0 = arith.cmpi eq, %arg0, %c0_i32 : i32
    %1 = arith.extui %0 : i1 to i32
    %c0_i32_0 = arith.constant 0 : i32
    %2 = arith.cmpi ne, %1, %c0_i32_0 : i32
    scf.if %2 {
      %c0_19 = arith.constant 0 : index
      %c0_20 = arith.constant 0 : index
      %54 = vector.load %arg3[%c0_19, %c0_20] : memref<4x128xf32, #tpu.memory_space<vmem>>, vector<4x128xf32>
      %c0_21 = arith.constant 0 : index
      %c0_22 = arith.constant 0 : index
      %55 = vector.load %arg6[%c0_21, %c0_22] : memref<4x128xf32, #tpu.memory_space<vmem>>, vector<4x128xf32>
      tpu.vector_store %arg6[%c0_21, %c0_22], %54 {strides = array<i32>} : memref<4x128xf32, #tpu.memory_space<vmem>>, vector<4x128xf32>,
    } else {
    }
    %c0 = arith.constant 0 : index
    %c0_1 = arith.constant 0 : index
    %c0_2 = arith.constant 0 : index
    %3 = vector.load %arg4[%c0, %c0_1, %c0_2] : memref<1x4x128xf32, #tpu.memory_space<vmem>>, vector<1x4x128xf32>
    %4 = vector.shape_cast %3 : vector<1x4x128xf32> to vector<4x128xf32>
    %c0_3 = arith.constant 0 : index
    %c0_4 = arith.constant 0 : index
    %5 = vector.load %arg1[%c0_3, %c0_4] : memref<4x4xf32, #tpu.memory_space<vmem>>, vector<4x4xf32>
    %cst = arith.constant 0.000000e+00 : f32
    %6 = vector.broadcast %cst : f32 to vector<4x128xf32>
    %7 = vector.extract_strided_slice %5 {offsets = [0, 0], sizes = [4, 1], strides = [1, 1]} : vector<4x4xf32> to vector<4x1xf32>
    %8 = vector.extract_strided_slice %4 {offsets = [0, 0], sizes = [1, 128], strides = [1, 1]} : vector<4x128xf32> to vector<1x128xf32>
    %9 = vector.broadcast %7 : vector<4x1xf32> to vector<4x128xf32>
    %10 = vector.broadcast %8 : vector<1x128xf32> to vector<4x128xf32>
    %11 = arith.mulf %9, %10 : vector<4x128xf32>
    %12 = arith.addf %6, %11 : vector<4x128xf32>
    %13 = vector.extract_strided_slice %5 {offsets = [0, 1], sizes = [4, 1], strides = [1, 1]} : vector<4x4xf32> to vector<4x1xf32>
    %14 = vector.extract_strided_slice %4 {offsets = [1, 0], sizes = [1, 128], strides = [1, 1]} : vector<4x128xf32> to vector<1x128xf32>
    %15 = vector.broadcast %13 : vector<4x1xf32> to vector<4x128xf32>
    %16 = vector.broadcast %14 : vector<1x128xf32> to vector<4x128xf32>
    %17 = arith.mulf %15, %16 : vector<4x128xf32>
    %18 = arith.addf %12, %17 : vector<4x128xf32>
    %19 = vector.extract_strided_slice %5 {offsets = [0, 2], sizes = [4, 1], strides = [1, 1]} : vector<4x4xf32> to vector<4x1xf32>
    %20 = vector.extract_strided_slice %4 {offsets = [2, 0], sizes = [1, 128], strides = [1, 1]} : vector<4x128xf32> to vector<1x128xf32>
    %21 = vector.broadcast %19 : vector<4x1xf32> to vector<4x128xf32>
    %22 = vector.broadcast %20 : vector<1x128xf32> to vector<4x128xf32>
    %23 = arith.mulf %21, %22 : vector<4x128xf32>
    %24 = arith.addf %18, %23 : vector<4x128xf32>
    %25 = vector.extract_strided_slice %5 {offsets = [0, 3], sizes = [4, 1], strides = [1, 1]} : vector<4x4xf32> to vector<4x1xf32>
    %26 = vector.extract_strided_slice %4 {offsets = [3, 0], sizes = [1, 128], strides = [1, 1]} : vector<4x128xf32> to vector<1x128xf32>
    %27 = vector.broadcast %25 : vector<4x1xf32> to vector<4x128xf32>
    %28 = vector.broadcast %26 : vector<1x128xf32> to vector<4x128xf32>
    %29 = arith.mulf %27, %28 : vector<4x128xf32>
    %30 = arith.addf %24, %29 : vector<4x128xf32>
    %c0_5 = arith.constant 0 : index
    %c0_6 = arith.constant 0 : index
    %31 = vector.load %arg2[%c0_5, %c0_6] : memref<4x1xf32, #tpu.memory_space<vmem>>, vector<4x1xf32>
    %32 = vector.broadcast %31 : vector<4x1xf32> to vector<4x128xf32>
    %33 = arith.addf %30, %32 : vector<4x128xf32>
    %34 = tpu.iota {dimensions = array<i32: 1>} : vector<4x128xi32>
    %c8_i32 = arith.constant 8 : i32
    %35 = vector.broadcast %c8_i32 : i32 to vector<4x128xi32>
    %36 = arith.cmpi slt, %34, %35 : vector<4x128xi32>
    %cst_7 = arith.constant 0.000000e+00 : f32
    %37 = vector.broadcast %cst_7 : f32 to vector<4x128xf32>
    %38 = arith.select %36, %33, %37 : vector<4x128xi1>, vector<4x128xf32>
    %39 = vector.shape_cast %38 : vector<4x128xf32> to vector<1x4x128xf32>
    %cst_8 = arith.constant dense<0.000000e+00> : vector<1xf32>
    %40 = vector.multi_reduction <add>, %39, %cst_8 [1, 2] : vector<1x4x128xf32> to vector<1xf32>
    %41 = vector.shape_cast %40 : vector<1xf32> to vector<1x1x1xf32>
    %42 = vector.extract %41[0, 0, 0] : f32 from vector<1x1x1xf32>
    %cst_9 = arith.constant 0.000000e+00 : f32
    %43 = arith.cmpf ogt, %42, %cst_9 : f32
    %cst_10 = arith.constant 1.000000e+00 : f32
    %cst_11 = arith.constant -1.000000e+00 : f32
    %44 = arith.select %43, %cst_10, %cst_11 : f32
    %45 = vector.broadcast %44 : f32 to vector<4x128xf32>
    %46 = arith.mulf %45, %33 : vector<4x128xf32>
    %c0_12 = arith.constant 0 : index
    %c0_13 = arith.constant 0 : index
    %47 = vector.load %arg6[%c0_12, %c0_13] : memref<4x128xf32, #tpu.memory_space<vmem>>, vector<4x128xf32>
    %48 = arith.addf %46, %47 : vector<4x128xf32>
    %49 = math.tanh %48 : vector<4x128xf32>
    %c0_14 = arith.constant 0 : index
    %c0_15 = arith.constant 0 : index
    %50 = vector.load %arg6[%c0_14, %c0_15] : memref<4x128xf32, #tpu.memory_space<vmem>>, vector<4x128xf32>
    tpu.vector_store %arg6[%c0_14, %c0_15], %49 {strides = array<i32>} : memref<4x128xf32, #tpu.memory_space<vmem>>, vector<4x128xf32>,
    %c0_16 = arith.constant 0 : index
    %c0_17 = arith.constant 0 : index
    %c0_18 = arith.constant 0 : index
    %51 = vector.load %arg5[%c0_16, %c0_17, %c0_18] : memref<1x4x128xf32, #tpu.memory_space<vmem>>, vector<1x4x128xf32>
    %52 = vector.shape_cast %51 : vector<1x4x128xf32> to vector<4x128xf32>
    %53 = vector.shape_cast %49 : vector<4x128xf32> to vector<1x4x128xf32>
    tpu.vector_store %arg5[%c0_16, %c0_17, %c0_18], %53 {strides = array<i32>} : memref<1x4x128xf32, #tpu.memory_space<vmem>>, vector<1x4x128xf32>,
    return
  }
  func.func @transform_0(%arg0: i32) -> (i32, i32) {
    %c0_i32 = arith.constant 0 : i32
    %c0_i32_0 = arith.constant 0 : i32
    %c0_i32_1 = arith.constant 0 : i32
    return %c0_i32, %c0_i32_0 : i32, i32
  }
  func.func @transform_1(%arg0: i32) -> (i32, i32) {
    %c0_i32 = arith.constant 0 : i32
    %c0_i32_0 = arith.constant 0 : i32
    %c0_i32_1 = arith.constant 0 : i32
    return %c0_i32, %c0_i32_0 : i32, i32
  }
  func.func @transform_2(%arg0: i32) -> (i32, i32) {
    %c0_i32 = arith.constant 0 : i32
    %c0_i32_0 = arith.constant 0 : i32
    %c0_i32_1 = arith.constant 0 : i32
    return %c0_i32, %c0_i32_0 : i32, i32
  }
  func.func @transform_3(%arg0: i32) -> (i32, i32, i32) {
    %c0_i32 = arith.constant 0 : i32
    %c0_i32_0 = arith.constant 0 : i32
    %c0_i32_1 = arith.constant 0 : i32
    return %arg0, %c0_i32, %c0_i32_0 : i32, i32, i32
  }
  func.func @transform_4(%arg0: i32) -> (i32, i32, i32) {
    %c0_i32 = arith.constant 0 : i32
    %c0_i32_0 = arith.constant 0 : i32
    %c0_i32_1 = arith.constant 0 : i32
    return %arg0, %c0_i32, %c0_i32_0 : i32, i32, i32
  }
}

</mosaic_0001>

<llo_original>
// kernel: tpu_custom_call.1
$region0: #{tpu_custom_call.1}
  #allocation0 [shape = 'u32[]', space=smem, size = 0x4, offset = 0x4, fixed_abs, tag = 'smem constant byte address 0x4 - core index']
  #allocation1 [shape = 'u32[72,128]{1,0:T(1,128)}', space=vmem, size = 0x9000, scoped, tag = 'internal scratch']
  #allocation2 [shape = 'f32[4,128]{1,0:T(4,128)}', space=vmem, size = 0x800, scoped, tag = 'scratch operand']
  %s0 = inlined_call_operand.vmem [shape: f32[4,4], index: 0, kind: input, shape index: {}]
  %s1 = inlined_call_operand.vmem [shape: f32[4,1], index: 1, kind: input, shape index: {}]
  %s2 = inlined_call_operand.hbm [shape: f32[4,128], index: 2, kind: input, shape index: {}]
  %s3 = inlined_call_operand.hbm [shape: f32[1,4,128], index: 3, kind: input, shape index: {}]
  %s4 = inlined_call_operand.hbm [shape: f32[1,4,128], index: 4, kind: output, shape index: {}]
  %s5 = sld [smem:[#allocation0]]
  $region38: #{tpu_custom_call.1} parent=0
    _
  %s7 = ssub.s32 1, %s5
  %s8 = scalar_select 0, %s7, %s5
  $region1: #{tpu_custom_call.1} parent=0
    #allocation3 [shape = 'u8[2048]{0}', space=vmem, size = 0x800, scoped, tag = 'input window, operand 2, single buffered']
    #allocation4 [shape = 's32[1]{0}', space=sflag, size = 0x4, scoped, tag = 'scoped memory for tpu_custom_call.1']
    #allocation5 [shape = 's32[1]{0}', space=sflag, size = 0x4, scoped, tag = 'scoped memory for tpu_custom_call.1']
    #allocation6 [shape = 'u8[2048]{0}', space=vmem, size = 0x800, scoped, tag = 'input window, operand 3, single buffered']
    #allocation7 [shape = 's32[1]{0}', space=sflag, size = 0x4, scoped, tag = 'scoped memory for tpu_custom_call.1']
    #allocation8 [shape = 'u8[2048]{0}', space=vmem, size = 0x800, scoped, tag = 'output window, operand 0, single buffered']
    %9 = vsyncpa [#allocation4], 0
    %10 = vsyncpa [#allocation7], 0
    %11 = vsyncpa [#allocation5], 0
    // Predicated region
    $region2: #{tpu_custom_call.1} parent=1 // pred_check
      _
    $region3: #{tpu_custom_call.1} parent=1 // pred_check_branch
      %13 = sbr.rel (0) target = $region5
    $region4: #{tpu_custom_call.1} parent=1 // pred_region
      _
    $region5: #{tpu_custom_call.1} parent=1 // pred_fallthru
      _
    // Predicated region
    $region6: #{tpu_custom_call.1} parent=1 // pred_check
      _
    $region7: #{tpu_custom_call.1} parent=1 // pred_check_branch
      %15 = sbr.rel (0) target = $region9
    $region8: #{tpu_custom_call.1} parent=1 // pred_region
      _
    $region9: #{tpu_custom_call.1} parent=1 // pred_fallthru
      _
    // Predicated region
    $region10: #{tpu_custom_call.1} parent=1 // pred_check
      _
    $region11: #{tpu_custom_call.1} parent=1 // pred_check_branch
      %17 = sbr.rel (0) target = $region13
    $region12: #{tpu_custom_call.1} parent=1 // pred_region
      %19 = vsyncadd [#allocation4], 0
      %s21 = sshll.u32 %s2, 4
      %s22 = int_to_ptr.hbm [resolvable:$true] %s21
      %s23 = sshll.u32 [#allocation3], 4
      %s24 = int_to_ptr.vmem [resolvable:$true] %s23
      %26 = dma.hbm_to_vmem [thread:$0]  %s22, 64, %s24, [#allocation4]
    $region13: #{tpu_custom_call.1} parent=1 // pred_fallthru
      _
    // Predicated region
    $region14: #{tpu_custom_call.1} parent=1 // pred_check
      _
    $region15: #{tpu_custom_call.1} parent=1 // pred_check_branch
      %28 = sbr.rel (0) target = $region17
    $region16: #{tpu_custom_call.1} parent=1 // pred_region
      %30 = vsyncadd [#allocation7], 0
      %s32 = sshll.u32 %s3, 4
      %s33 = int_to_ptr.hbm [resolvable:$true] %s32
      %s34 = sshll.u32 [#allocation6], 4
      %s35 = int_to_ptr.vmem [resolvable:$true] %s34
      %37 = dma.hbm_to_vmem [thread:$0]  %s33, 64, %s35, [#allocation7]
    $region17: #{tpu_custom_call.1} parent=1 // pred_fallthru
      _
    // Predicated region
    $region18: #{tpu_custom_call.1} parent=1 // pred_check
      _
    $region19: #{tpu_custom_call.1} parent=1 // pred_check_branch
      %39 = sbr.rel (0) target = $region21
    $region20: #{tpu_custom_call.1} parent=1 // pred_region
      %41 = dma.done [#allocation4], 64
    $region21: #{tpu_custom_call.1} parent=1 // pred_fallthru
      _
    // Predicated region
    $region22: #{tpu_custom_call.1} parent=1 // pred_check
      _
    $region23: #{tpu_custom_call.1} parent=1 // pred_check_branch
      %43 = sbr.rel (0) target = $region25
    $region24: #{tpu_custom_call.1} parent=1 // pred_region
      %45 = dma.done [#allocation7], 64
    $region25: #{tpu_custom_call.1} parent=1 // pred_fallthru
      _
    %p46 = scmp.eq.s32.totalorder 0, 0
    // Predicated region
    $region26: #{tpu_custom_call.1} parent=1 // pred_check
      %p47 = pneg %p46
    $region27: #{tpu_custom_call.1} parent=1 // pred_check_branch
      %49 = sbr.rel (%p47) target = $region29
    $region28: #{tpu_custom_call.1} parent=1 // pred_region
      %v50 = vld [vmem:[#allocation3] sm:$0xf]
      %51 = vst [vmem:[#allocation2] sm:$0xf] %v50
    $region29: #{tpu_custom_call.1} parent=1 // pred_fallthru
      _
    %v52 = vld [vmem:[#allocation6] sm:$0xf]
    %v53 = vld [vmem:[%s0] sm:$0xf]
    %55 = vset.pattern.permute.xlu0 0
    %56 = vperm.xlu0 %55, %v53
    %v57 = vpop.permute.xlu0 %56
    %v59 = vperm.slane %v52, 0
    %v60 = vmul.f32 %v57, %v59
    %v61 = vadd.f32 %v60, 0.0
    %62 = vset.pattern.permute.xlu0 1
    %63 = vperm.xlu0 %62, %v53
    %v64 = vpop.permute.xlu0 %63
    %v66 = vperm.slane %v52, 1
    %v67 = vmul.f32 %v64, %v66
    %v68 = vadd.f32 %v61, %v67
    %69 = vset.pattern.permute.xlu0 2
    %70 = vperm.xlu0 %69, %v53
    %v71 = vpop.permute.xlu0 %70
    %v73 = vperm.slane %v52, 2
    %v74 = vmul.f32 %v71, %v73
    %v75 = vadd.f32 %v68, %v74
    %76 = vset.pattern.permute.xlu0 3
    %77 = vperm.xlu0 %76, %v53
    %v78 = vpop.permute.xlu0 %77
    %v80 = vperm.slane %v52, 3
    %v81 = vmul.f32 %v78, %v80
    %v82 = vadd.f32 %v75, %v81
    %v83 = vld [vmem:[%s1] sm:$0xf]
    %85 = vset.pattern.permute.xlu0 0
    %86 = vperm.xlu0 %85, %v83
    %v87 = vpop.permute.xlu0 %86
    %v89 = vadd.f32 %v82, %v87
    %v90 = vlaneseq
    %v91 = vand.u32 %v90, 127
    %vm92 = vcmp.lt.s32.totalorder %v91, 8
    %v93 = vsel %vm92, %v89, 0.0
    %vm94 = vcmask 1043456
    %v95 = vsel %vm94, %v93, 0.0
    %96 = vadd.xlane.f32.xlu0 %v95
    %v97 = vpop.xlane.xlu0 %96
    %v98 = vrot.slane %v97, 4
    %v99 = vadd.f32 %v97, %v98
    %v100 = vrot.slane %v99, 2
    %v101 = vadd.f32 %v99, %v100
    %v102 = vrot.slane %v101, 1
    %v103 = vadd.f32 %v101, %v102
    %s104 = vtos %v103
    %p105 = scmp.gt.f32.partialorder %s104, 0.0
    %s106 = scalar_select %p105, 1.0, -1.0
    %v107 = vstv %s106
    %v108 = vmul.f32 %v107, %v89
    %v109 = vld [vmem:[#allocation2] sm:$0xf]
    %v110 = vadd.f32 %v108, %v109
    %v111 = vtanh.pop %v110
    %112 = vst [vmem:[#allocation2] sm:$0xf] %v111
    %113 = vst [vmem:[#allocation8] sm:$0xf] %v111
    // Predicated region
    $region30: #{tpu_custom_call.1} parent=1 // pred_check
      _
    $region31: #{tpu_custom_call.1} parent=1 // pred_check_branch
      %115 = sbr.rel (0) target = $region33
    $region32: #{tpu_custom_call.1} parent=1 // pred_region
      %117 = vsyncadd [#allocation5], 0
      %s119 = sshll.u32 [#allocation8], 4
      %s120 = int_to_ptr.vmem [resolvable:$true] %s119
      %s121 = sshll.u32 %s4, 4
      %s122 = int_to_ptr.hbm [resolvable:$true] %s121
      %124 = dma.vmem_to_hbm [thread:$0]  %s120, 64, %s122, [#allocation5]
    $region33: #{tpu_custom_call.1} parent=1 // pred_fallthru
      _
    // Predicated region
    $region34: #{tpu_custom_call.1} parent=1 // pred_check
      _
    $region35: #{tpu_custom_call.1} parent=1 // pred_check_branch
      %126 = sbr.rel (0) target = $region37
    $region36: #{tpu_custom_call.1} parent=1 // pred_region
      %128 = dma.done [#allocation5], 64
    $region37: #{tpu_custom_call.1} parent=1 // pred_fallthru
      _
    %129 = vsyncpa [#allocation4], 1
    %130 = vsyncpa [#allocation7], 1
    %131 = vsyncpa [#allocation5], 1

</llo_original>
